<compile_context>
chip_gen: v7x
topology: tpu7x:2x2x1
jax: 0.10.0
libtpu: 0.0.40
codegen_flags: <defaults>
</compile_context>

<pallas_src>
import jax
import jax.numpy as jnp
from jax import lax
from jax.experimental import pallas as pl
from jax.experimental.pallas import tpu as pltpu

HIGH = jax.lax.Precision.HIGHEST


# ----------------------------------------------------------------------------
# Pallas kernel: single fused matmul + gates + dynamic LN, HW on lanes
# ----------------------------------------------------------------------------
def residual_adapter_kernel(pat_ref, m_ref, w_ref, b_ref, out_ref):
    nh = out_ref.shape[0]

    # (5*nh, K) @ (K, HW) -> (5*nh, HW), f32 accumulation on the MXU.
    acts = jnp.dot(w_ref[...], pat_ref[...],
                   preferred_element_type=jnp.float32) + b_ref[...]

    i_t = jax.nn.sigmoid(acts[0 * nh:1 * nh])      # i_x + i_m (+bias)
    f_t = jax.nn.sigmoid(acts[1 * nh:2 * nh])      # f_x + f_m + forget_bias (folded)
    g_t = jnp.tanh(acts[2 * nh:3 * nh])            # g_x + g_m (+bias)
    mean_x = acts[3 * nh:4 * nh]                   # gate_x output, first half
    sigma_x = acts[4 * nh:5 * nh]                  # gate_x output, second half

    m_new = f_t * m_ref[...] + i_t * g_t

    # Dynamic layer norm over the whole per-sample (C, H*W) block, one pass.
    mu = jnp.mean(m_new)
    var = jnp.maximum(jnp.mean(m_new * m_new) - mu * mu, 0.0)
    normed = (m_new - mu) * lax.rsqrt(var + 1e-5)

    out_ref[...] = (normed * sigma_x + mean_x).astype(out_ref.dtype)


# ----------------------------------------------------------------------------
# JAX glue: im2col producing (N, C*k*k, H*W) -- channels/taps on sublanes,
# pixels on lanes (row ordering matches torch weight.reshape: c-major, kh, kw)
# ----------------------------------------------------------------------------
def im2col_khw(x_nchw, k, pad):
    N, C, H, W = x_nchw.shape
    xp = jnp.pad(x_nchw, ((0, 0), (0, 0), (pad, pad), (pad, pad)))
    taps = []
    for dh in range(k):
        for dw in range(k):
            taps.append(xp[:, :, dh:dh + H, dw:dw + W])      # (N, C, H, W)
    p = jnp.stack(taps, axis=2)                               # (N, C, k*k, H, W)
    return p.reshape(N, C * k * k, H * W)                     # (N, C*k*k, HW)


def _vmem_limit_bytes(K, HW, nh):
    block = (2 * K * HW * 2            # patches (bf16, double-buffered)
             + 2 * nh * HW * 4         # m_t flat (f32)
             + 2 * nh * HW * 4         # output
             + 2 * (5 * nh * K * 2 + 5 * nh * 4))   # fused weight + bias
    return int(min(max(6 * block, 4 << 20), 32 << 20))


def residual_adapter_forward(x_t, m_t, params, num_hidden, filter_size):
    """x_t, m_t in NCHW.  Returns m_new in NCHW."""
    N, Cin, H, W = x_t.shape
    nh = num_hidden
    k = filter_size
    pad = k // 2
    k2 = k * k
    HW = H * W
    Kx = Cin * k2
    Km = nh * k2
    K = Kx + Km
    center = pad * k + pad                          # center tap inside a k*k block

    # Fused patch operand: (N, K, HW), bf16 for the MXU, HW on lanes.
    pat = jnp.concatenate(
        [im2col_khw(x_t, k, pad), im2col_khw(m_t, k, pad)], axis=1
    ).astype(jnp.bfloat16)
    mflat = m_t.reshape(N, nh, HW)                  # f32 for elementwise math

    # Fused weight (5*nh, K): output rows = [i, f, g, mean_x, sigma_x].
    wx = params["wx"].reshape(4 * nh, Kx)[:3 * nh]  # drop unused o_x gate
    wm = params["wm"].reshape(3 * nh, Km)
    wg = params["wg"].reshape(2 * nh, nh)
    Wf = jnp.zeros((5 * nh, K), jnp.float32)
    Wf = Wf.at[:3 * nh, :Kx].set(wx)
    Wf = Wf.at[:3 * nh, Kx:].set(wm)
    # 1x1 gate_x(m_t) == center taps of the m-patch block.
    Wf = Wf.at[3 * nh:, Kx + center::k2].set(wg)
    Wf = Wf.astype(jnp.bfloat16)

    # Fused bias (f32): bx[:3nh] + bm for the gates (forget bias folded), bg.
    bf = jnp.concatenate([params["bx"][:3 * nh] + params["bm"], params["bg"]])
    bf = bf.at[nh:2 * nh].add(1.0)
    bf = bf.reshape(5 * nh, 1).astype(jnp.float32)

    full = lambda shape: pl.BlockSpec(shape, lambda b: (0,) * len(shape))
    per_sample = lambda r, c: pl.BlockSpec((pl.Squeezed(), r, c),
                                           lambda b: (b, 0, 0))

    out = pl.pallas_call(
        residual_adapter_kernel,
        out_shape=jax.ShapeDtypeStruct((N, nh, HW), x_t.dtype),
        grid_spec=pltpu.PrefetchScalarGridSpec(
            num_scalar_prefetch=0,
            grid=(N,),
            in_specs=[
                per_sample(K, HW),          # fused x|m patches (bf16)
                per_sample(nh, HW),         # m_t flat (f32)
                full((5 * nh, K)),          # fused weights (bf16, grid-invariant)
                full((5 * nh, 1)),          # fused bias (f32, grid-invariant)
            ],
            out_specs=per_sample(nh, HW),
        ),
        compiler_params=pltpu.CompilerParams(
            dimension_semantics=("parallel",),
            vmem_limit_bytes=_vmem_limit_bytes(K, HW, nh)),
    )(pat, mflat, Wf, bf)

    # (N, nh, HW) -> NCHW is a pure reshape (no transpose needed).
    return out.reshape(N, nh, H, W)


# ----------------------------------------------------------------------------
# Pure-JAX f32 reference (same semantics) for a sanity check
# ----------------------------------------------------------------------------
def conv2d_ref(x, w, b, pad):
    y = lax.conv_general_dilated(
        x, w, window_strides=(1, 1), padding=[(pad, pad), (pad, pad)],
        dimension_numbers=("NCHW", "OIHW", "NCHW"), precision=HIGH)
    return y + b[None, :, None, None]


def residual_adapter_ref(x_t, m_t, params, num_hidden, filter_size):
    nh = num_hidden
    pad = filter_size // 2
    x_concat = conv2d_ref(x_t, params["wx"], params["bx"], pad)
    m_concat = conv2d_ref(m_t, params["wm"], params["bm"], pad)
    feat = conv2d_ref(m_t, params["wg"], params["bg"], 0)
    mean_x, sigma_x = feat[:, :nh], feat[:, nh:]
    i_x, f_x, g_x, _ = jnp.split(x_concat, 4, axis=1)
    i_m, f_m, g_m = jnp.split(m_concat, 3, axis=1)
    i_t = jax.nn.sigmoid(i_x + i_m)
    f_t = jax.nn.sigmoid(f_x + f_m + 1.0)
    g_t = jnp.tanh(g_x + g_m)
    m_new = f_t * m_t + i_t * g_t
    mu = jnp.mean(m_new, axis=(1, 2, 3), keepdims=True)
    var = jnp.mean((m_new - mu) ** 2, axis=(1, 2, 3), keepdims=True)
    normed = (m_new - mu) * lax.rsqrt(var + 1e-5)
    return normed * sigma_x + mean_x


# ----------------------------------------------------------------------------
if __name__ == "__main__":
    N, Cin, H, W = 2, 4, 16, 16
    num_hidden = 8
    filter_size = 3
    k = filter_size

    key = jax.random.PRNGKey(0)
    ks = jax.random.split(key, 8)

    x_t = jax.random.normal(ks[0], (N, Cin, H, W), jnp.float32)
    m_t = jax.random.normal(ks[1], (N, num_hidden, H, W), jnp.float32)

    params = {
        "wx": 0.1 * jax.random.normal(ks[2], (4 * num_hidden, Cin, k, k), jnp.float32),
        "bx": 0.1 * jax.random.normal(ks[3], (4 * num_hidden,), jnp.float32),
        "wm": 0.1 * jax.random.normal(ks[4], (3 * num_hidden, num_hidden, k, k), jnp.float32),
        "bm": 0.1 * jax.random.normal(ks[5], (3 * num_hidden,), jnp.float32),
        "wg": 0.1 * jax.random.normal(ks[6], (2 * num_hidden, num_hidden, 1, 1), jnp.float32),
        "bg": 0.1 * jax.random.normal(ks[7], (2 * num_hidden,), jnp.float32),
    }

    out = residual_adapter_forward(x_t, m_t, params, num_hidden, filter_size)
    out = jax.block_until_ready(out)

    ref = residual_adapter_ref(x_t, m_t, params, num_hidden, filter_size)
    ref = jax.block_until_ready(ref)

    assert out.shape == (N, num_hidden, H, W)
    max_err = float(jnp.max(jnp.abs(out - ref)))
    # bf16 matmul operands (f32 accumulation) -> slightly relaxed tolerance.
    assert jnp.allclose(out, ref, rtol=5e-2, atol=5e-2), max_err

    print("KERNEL_OK")
</pallas_src>

<mosaic_0001>
module attributes {stable_mosaic.version = 11 : i64} {
  func.func @residual_adapter_kernel(%arg0: i32, %arg1: memref<1x108x256xbf16, #tpu.memory_space<vmem>>, %arg2: memref<1x8x256xf32, #tpu.memory_space<vmem>>, %arg3: memref<40x108xbf16, #tpu.memory_space<vmem>>, %arg4: memref<40x1xf32, #tpu.memory_space<vmem>>, %arg5: memref<1x8x256xf32, #tpu.memory_space<vmem>>) attributes {dimension_semantics = [#tpu.dimension_semantics<parallel>], iteration_bounds = array<i64: 2>, scalar_prefetch = 0 : i64, scratch_operands = 0 : i64, tpu.core_type = #tpu.core_type<tc>, window_params = [{transform_indices = @transform_0, window_bounds = array<i64: 1, 108, 256>}, {transform_indices = @transform_1, window_bounds = array<i64: 1, 8, 256>}, {pipeline_mode = #tpu.pipeline_mode<synchronous>, transform_indices = @transform_2, window_bounds = array<i64: 40, 108>}, {pipeline_mode = #tpu.pipeline_mode<synchronous>, transform_indices = @transform_3, window_bounds = array<i64: 40, 1>}, {transform_indices = @transform_4, window_bounds = array<i64: 1, 8, 256>}]} {
    %c0 = arith.constant 0 : index
    %c0_0 = arith.constant 0 : index
    %0 = vector.load %arg3[%c0, %c0_0] : memref<40x108xbf16, #tpu.memory_space<vmem>>, vector<40x108xbf16>
    %c0_1 = arith.constant 0 : index
    %c0_2 = arith.constant 0 : index
    %c0_3 = arith.constant 0 : index
    %1 = vector.load %arg1[%c0_1, %c0_2, %c0_3] : memref<1x108x256xbf16, #tpu.memory_space<vmem>>, vector<1x108x256xbf16>
    %2 = vector.shape_cast %1 : vector<1x108x256xbf16> to vector<108x256xbf16>
    %cst = arith.constant dense<0.000000e+00> : vector<40x256xf32>
    %3 = tpu.matmul %0, %2, %cst {dimension_numbers = #tpu.dot_dimension_numbers<[1], [0], [0], [1], [0, 0, 1, 1], [], []>} : vector<40x108xbf16>, vector<108x256xbf16>, vector<40x256xf32> -> vector<40x256xf32>
    %c0_4 = arith.constant 0 : index
    %c0_5 = arith.constant 0 : index
    %4 = vector.load %arg4[%c0_4, %c0_5] : memref<40x1xf32, #tpu.memory_space<vmem>>, vector<40x1xf32>
    %5 = vector.broadcast %4 : vector<40x1xf32> to vector<40x256xf32>
    %6 = arith.addf %3, %5 : vector<40x256xf32>
    %7 = vector.extract_strided_slice %6 {offsets = [0, 0], sizes = [8, 256], strides = [1, 1]} : vector<40x256xf32> to vector<8x256xf32>
    %8 = arith.negf %7 : vector<8x256xf32>
    %9 = math.exp %8 : vector<8x256xf32>
    %cst_6 = arith.constant 1.000000e+00 : f32
    %10 = vector.broadcast %cst_6 : f32 to vector<8x256xf32>
    %11 = arith.addf %10, %9 : vector<8x256xf32>
    %12 = arith.divf %10, %11 : vector<8x256xf32>
    %13 = vector.extract_strided_slice %6 {offsets = [8, 0], sizes = [8, 256], strides = [1, 1]} : vector<40x256xf32> to vector<8x256xf32>
    %14 = arith.negf %13 : vector<8x256xf32>
    %15 = math.exp %14 : vector<8x256xf32>
    %cst_7 = arith.constant 1.000000e+00 : f32
    %16 = vector.broadcast %cst_7 : f32 to vector<8x256xf32>
    %17 = arith.addf %16, %15 : vector<8x256xf32>
    %18 = arith.divf %16, %17 : vector<8x256xf32>
    %19 = vector.extract_strided_slice %6 {offsets = [16, 0], sizes = [8, 256], strides = [1, 1]} : vector<40x256xf32> to vector<8x256xf32>
    %20 = math.tanh %19 : vector<8x256xf32>
    %21 = vector.extract_strided_slice %6 {offsets = [24, 0], sizes = [8, 256], strides = [1, 1]} : vector<40x256xf32> to vector<8x256xf32>
    %22 = vector.extract_strided_slice %6 {offsets = [32, 0], sizes = [8, 256], strides = [1, 1]} : vector<40x256xf32> to vector<8x256xf32>
    %c0_8 = arith.constant 0 : index
    %c0_9 = arith.constant 0 : index
    %c0_10 = arith.constant 0 : index
    %23 = vector.load %arg2[%c0_8, %c0_9, %c0_10] : memref<1x8x256xf32, #tpu.memory_space<vmem>>, vector<1x8x256xf32>
    %24 = vector.shape_cast %23 : vector<1x8x256xf32> to vector<8x256xf32>
    %25 = arith.mulf %18, %24 : vector<8x256xf32>
    %26 = arith.mulf %12, %20 : vector<8x256xf32>
    %27 = arith.addf %25, %26 : vector<8x256xf32>
    %28 = vector.shape_cast %27 : vector<8x256xf32> to vector<1x8x256xf32>
    %cst_11 = arith.constant dense<0.000000e+00> : vector<1xf32>
    %29 = vector.multi_reduction <add>, %28, %cst_11 [1, 2] : vector<1x8x256xf32> to vector<1xf32>
    %30 = vector.shape_cast %29 : vector<1xf32> to vector<1x1x1xf32>
    %31 = vector.extract %30[0, 0, 0] : f32 from vector<1x1x1xf32>
    %cst_12 = arith.constant 2.048000e+03 : f32
    %32 = arith.divf %31, %cst_12 : f32
    %33 = arith.mulf %27, %27 : vector<8x256xf32>
    %34 = vector.shape_cast %33 : vector<8x256xf32> to vector<1x8x256xf32>
    %cst_13 = arith.constant dense<0.000000e+00> : vector<1xf32>
    %35 = vector.multi_reduction <add>, %34, %cst_13 [1, 2] : vector<1x8x256xf32> to vector<1xf32>
    %36 = vector.shape_cast %35 : vector<1xf32> to vector<1x1x1xf32>
    %37 = vector.extract %36[0, 0, 0] : f32 from vector<1x1x1xf32>
    %cst_14 = arith.constant 2.048000e+03 : f32
    %38 = arith.divf %37, %cst_14 : f32
    %39 = arith.mulf %32, %32 : f32
    %40 = arith.subf %38, %39 : f32
    %cst_15 = arith.constant 0.000000e+00 : f32
    %41 = arith.maximumf %40, %cst_15 : f32
    %42 = vector.broadcast %32 : f32 to vector<8x256xf32>
    %43 = arith.subf %27, %42 : vector<8x256xf32>
    %cst_16 = arith.constant 9.99999974E-6 : f32
    %44 = arith.addf %41, %cst_16 : f32
    %45 = math.rsqrt %44 : f32
    %46 = vector.broadcast %45 : f32 to vector<8x256xf32>
    %47 = arith.mulf %43, %46 : vector<8x256xf32>
    %48 = arith.mulf %47, %22 : vector<8x256xf32>
    %49 = arith.addf %48, %21 : vector<8x256xf32>
    %c0_17 = arith.constant 0 : index
    %c0_18 = arith.constant 0 : index
    %c0_19 = arith.constant 0 : index
    %50 = vector.load %arg5[%c0_17, %c0_18, %c0_19] : memref<1x8x256xf32, #tpu.memory_space<vmem>>, vector<1x8x256xf32>
    %51 = vector.shape_cast %50 : vector<1x8x256xf32> to vector<8x256xf32>
    %52 = vector.shape_cast %49 : vector<8x256xf32> to vector<1x8x256xf32>
    tpu.vector_store %arg5[%c0_17, %c0_18, %c0_19], %52 {strides = array<i32>} : memref<1x8x256xf32, #tpu.memory_space<vmem>>, vector<1x8x256xf32>,
    return
  }
  func.func @transform_0(%arg0: i32) -> (i32, i32, i32) {
    %c0_i32 = arith.constant 0 : i32
    %c0_i32_0 = arith.constant 0 : i32
    %c0_i32_1 = arith.constant 0 : i32
    return %arg0, %c0_i32, %c0_i32_0 : i32, i32, i32
  }
  func.func @transform_1(%arg0: i32) -> (i32, i32, i32) {
    %c0_i32 = arith.constant 0 : i32
    %c0_i32_0 = arith.constant 0 : i32
    %c0_i32_1 = arith.constant 0 : i32
    return %arg0, %c0_i32, %c0_i32_0 : i32, i32, i32
  }
  func.func @transform_2(%arg0: i32) -> (i32, i32) {
    %c0_i32 = arith.constant 0 : i32
    %c0_i32_0 = arith.constant 0 : i32
    %c0_i32_1 = arith.constant 0 : i32
    return %c0_i32, %c0_i32_0 : i32, i32
  }
  func.func @transform_3(%arg0: i32) -> (i32, i32) {
    %c0_i32 = arith.constant 0 : i32
    %c0_i32_0 = arith.constant 0 : i32
    %c0_i32_1 = arith.constant 0 : i32
    return %c0_i32, %c0_i32_0 : i32, i32
  }
  func.func @transform_4(%arg0: i32) -> (i32, i32, i32) {
    %c0_i32 = arith.constant 0 : i32
    %c0_i32_0 = arith.constant 0 : i32
    %c0_i32_1 = arith.constant 0 : i32
    return %arg0, %c0_i32, %c0_i32_0 : i32, i32, i32
  }
}

</mosaic_0001>

<llo_original>
// kernel: tpu_custom_call.1
$region0: #{tpu_custom_call.1}
  #allocation0 [shape = 'u32[]', space=smem, size = 0x4, offset = 0x4, fixed_abs, tag = 'smem constant byte address 0x4 - core index']
  #allocation1 [shape = 'u32[144,128]{1,0:T(1,128)}', space=vmem, size = 0x12000, scoped, tag = 'internal scratch']
  %s0 = inlined_call_operand.vmem [shape: bf16[2,108,256], index: 0, kind: input, shape index: {}]
  %s1 = inlined_call_operand.vmem [shape: f32[2,8,256], index: 1, kind: input, shape index: {}]
  %s2 = inlined_call_operand.vmem [shape: bf16[40,108], index: 2, kind: input, shape index: {}]
  %s3 = inlined_call_operand.vmem [shape: f32[40,1], index: 3, kind: input, shape index: {}]
  %s4 = inlined_call_operand.hbm [shape: f32[2,8,256], index: 4, kind: output, shape index: {}]
  %s5 = sld [smem:[#allocation0]]
  $region49: #{tpu_custom_call.1} parent=0
    _
  %s7 = ssub.s32 1, %s5
  %s8 = scalar_select 0, %s7, %s5
  $region1: #{tpu_custom_call.1} parent=0
    #allocation2 [shape = 'u8[16384]{0}', space=vmem, size = 0x4000, scoped, tag = 'output window, operand 0']
    #allocation3 [shape = 's32[2]{0}', space=sflag, size = 0x8, scoped, tag = 'scoped memory for tpu_custom_call.1']
    %9 = vsyncpa [#allocation3], 0
    %s10 = scalar_lea.sflag [#allocation3], 1
    %11 = vsyncpa %s10, 0
    loop: start=0, step=1, limit=4
    $region2: #{tpu_custom_call.1} parent=1 // loop_pre_header
      _
    $region3: #{tpu_custom_call.1} parent=1 // loop_header
      %s13 = sphi 0, %s17
      %p14 = scmp.ge.s32.totalorder %s13, 4
      %s23 = sphi 0, %s25
      %s26 = sphi 0, %s23
      %s27 = sphi 0, %s26
      %s43 = sphi 0, %s27
      %s49 = sphi 0, %s51
      %s52 = sphi 0, %s49
      %s53 = sphi 0, %s52
      %s69 = sphi 0, %s53
      %s73 = sphi 0, %s73
      %s75 = sphi 0, %s73
      %s76 = sphi 0, %s75
      %s90 = sphi 0, %s76
      %s94 = sphi 0, %s94
      %s96 = sphi 0, %s94
      %s97 = sphi 0, %s96
      %s111 = sphi 0, %s97
      %s117 = sphi 0, %s119
      %s120 = sphi 0, %s117
      %s121 = sphi 0, %s120
      %s137 = sphi 0, %s121
    $region4: #{tpu_custom_call.1} parent=1 // loop_header_branch
      %16 = sbr.rel (%p14) target = $region8
    $region5: #{tpu_custom_call.1} parent=1 // loop_body
      %s18 = ssub.s32 %s13, 1
      %s19 = ssub.s32 %s13, 2
      %s20 = sadd.s32 %s13, 1
      %s21 = ssub.s32 %s13, %s20
      %p22 = scmp.eq.s32.totalorder %s21, 0
      %s24 = sadd.s32 %s23, 1
      %s25 = scalar_select %p22, %s23, %s24
      %p28 = pneg %p22
      %p29 = scmp.eq.s32.totalorder %s13, 1
      %p30 = por %p28, %p29
      %p31 = scmp.ne.s32.totalorder %s23, %s26
      %p32 = scmp.eq.s32.totalorder %s13, 0
      %p33 = por %p31, %p32
      %p34 = scmp.ne.s32.totalorder %s23, %s26
      %p35 = scmp.eq.s32.totalorder %s18, 1
      %p36 = por %p34, %p35
      %p37 = scmp.ne.s32.totalorder %s26, %s27
      %p38 = scmp.eq.s32.totalorder %s18, 0
      %p39 = por %p37, %p38
      %p40 = scmp.ne.s32.totalorder %s26, %s27
      %p41 = scmp.eq.s32.totalorder %s19, 1
      %p42 = por %p40, %p41
      %p44 = scmp.ne.s32.totalorder %s27, %s43
      %p45 = scmp.eq.s32.totalorder %s19, 0
      %p46 = por %p44, %p45
      %s47 = ssub.s32 %s13, %s20
      %p48 = scmp.eq.s32.totalorder %s47, 0
      %s50 = sadd.s32 %s49, 1
      %s51 = scalar_select %p48, %s49, %s50
      %p54 = pneg %p48
      %p55 = scmp.eq.s32.totalorder %s13, 1
      %p56 = por %p54, %p55
      %p57 = scmp.ne.s32.totalorder %s49, %s52
      %p58 = scmp.eq.s32.totalorder %s13, 0
      %p59 = por %p57, %p58
      %p60 = scmp.ne.s32.totalorder %s49, %s52
      %p61 = scmp.eq.s32.totalorder %s18, 1
      %p62 = por %p60, %p61
      %p63 = scmp.ne.s32.totalorder %s52, %s53
      %p64 = scmp.eq.s32.totalorder %s18, 0
      %p65 = por %p63, %p64
      %p66 = scmp.ne.s32.totalorder %s52, %s53
      %p67 = scmp.eq.s32.totalorder %s19, 1
      %p68 = por %p66, %p67
      %p70 = scmp.ne.s32.totalorder %s53, %s69
      %p71 = scmp.eq.s32.totalorder %s19, 0
      %p72 = por %p70, %p71
      %s74 = sadd.s32 %s73, 1
      %p77 = scmp.eq.s32.totalorder %s13, 1
      %p78 = scmp.ne.s32.totalorder %s73, %s75
      %p79 = scmp.eq.s32.totalorder %s13, 0
      %p80 = por %p78, %p79
      %p81 = scmp.ne.s32.totalorder %s73, %s75
      %p82 = scmp.eq.s32.totalorder %s18, 1
      %p83 = por %p81, %p82
      %p84 = scmp.ne.s32.totalorder %s75, %s76
      %p85 = scmp.eq.s32.totalorder %s18, 0
      %p86 = por %p84, %p85
      %p87 = scmp.ne.s32.totalorder %s75, %s76
      %p88 = scmp.eq.s32.totalorder %s19, 1
      %p89 = por %p87, %p88
      %p91 = scmp.ne.s32.totalorder %s76, %s90
      %p92 = scmp.eq.s32.totalorder %s19, 0
      %p93 = por %p91, %p92
      %s95 = sadd.s32 %s94, 1
      %p98 = scmp.eq.s32.totalorder %s13, 1
      %p99 = scmp.ne.s32.totalorder %s94, %s96
      %p100 = scmp.eq.s32.totalorder %s13, 0
      %p101 = por %p99, %p100
      %p102 = scmp.ne.s32.totalorder %s94, %s96
      %p103 = scmp.eq.s32.totalorder %s18, 1
      %p104 = por %p102, %p103
      %p105 = scmp.ne.s32.totalorder %s96, %s97
      %p106 = scmp.eq.s32.totalorder %s18, 0
      %p107 = por %p105, %p106
      %p108 = scmp.ne.s32.totalorder %s96, %s97
      %p109 = scmp.eq.s32.totalorder %s19, 1
      %p110 = por %p108, %p109
      %p112 = scmp.ne.s32.totalorder %s97, %s111
      %p113 = scmp.eq.s32.totalorder %s19, 0
      %p114 = por %p112, %p113
      %s115 = ssub.s32 %s13, %s20
      %p116 = scmp.eq.s32.totalorder %s115, 0
      %s118 = sadd.s32 %s117, 1
      %s119 = scalar_select %p116, %s117, %s118
      %p122 = pneg %p116
      %p123 = scmp.eq.s32.totalorder %s13, 1
      %p124 = por %p122, %p123
      %p125 = scmp.ne.s32.totalorder %s117, %s120
      %p126 = scmp.eq.s32.totalorder %s13, 0
      %p127 = por %p125, %p126
      %p128 = scmp.ne.s32.totalorder %s117, %s120
      %p129 = scmp.eq.s32.totalorder %s18, 1
      %p130 = por %p128, %p129
      %p131 = scmp.ne.s32.totalorder %s120, %s121
      %p132 = scmp.eq.s32.totalorder %s18, 0
      %p133 = por %p131, %p132
      %p134 = scmp.ne.s32.totalorder %s120, %s121
      %p135 = scmp.eq.s32.totalorder %s19, 1
      %p136 = por %p134, %p135
      %p138 = scmp.ne.s32.totalorder %s121, %s137
      %p139 = scmp.eq.s32.totalorder %s19, 0
      %p140 = por %p138, %p139
      %p141 = scmp.le.s32.totalorder 1, %s13
      %p142 = scmp.lt.s32.totalorder %s13, 3
      %p143 = pnand %p141, %p142
      %p144 = pneg %p143
      // Predicated region
      $region9: #{tpu_custom_call.1} parent=5 // pred_check
        _
      $region10: #{tpu_custom_call.1} parent=5 // pred_check_branch
        %146 = sbr.rel (%p143) target = $region12
      $region11: #{tpu_custom_call.1} parent=5 // pred_region
        %s147 = ssub.s32 %s13, 1
        // Predicated region
        $region13: #{tpu_custom_call.1} parent=11 // pred_check
          %p148 = pneg %p86
        $region14: #{tpu_custom_call.1} parent=11 // pred_check_branch
          %150 = sbr.rel (%p148) target = $region16
        $region15: #{tpu_custom_call.1} parent=11 // pred_region
          _
        $region16: #{tpu_custom_call.1} parent=11 // pred_fallthru
          _
        // Predicated region
        $region17: #{tpu_custom_call.1} parent=11 // pred_check
          %p151 = pneg %p107
        $region18: #{tpu_custom_call.1} parent=11 // pred_check_branch
          %153 = sbr.rel (%p151) target = $region20
        $region19: #{tpu_custom_call.1} parent=11 // pred_region
          _
        $region20: #{tpu_custom_call.1} parent=11 // pred_fallthru
          _
      $region12: #{tpu_custom_call.1} parent=5 // pred_fallthru
        _
      %p154 = scmp.lt.s32.totalorder %s13, 2
      // Predicated region
      $region21: #{tpu_custom_call.1} parent=5 // pred_check
        %p155 = pneg %p154
      $region22: #{tpu_custom_call.1} parent=5 // pred_check_branch
        %157 = sbr.rel (%p155) target = $region24
      $region23: #{tpu_custom_call.1} parent=5 // pred_region
        // Predicated region
        $region25: #{tpu_custom_call.1} parent=23 // pred_check
          %p158 = pneg %p33
        $region26: #{tpu_custom_call.1} parent=23 // pred_check_branch
          %160 = sbr.rel (%p158) target = $region28
        $region27: #{tpu_custom_call.1} parent=23 // pred_region
          %p161 = scmp.lt.s32.totalorder %s13, 1
          %s162 = scalar_select %p161, %s13, 1
          %s163 = smul.addr %s162, 28
          %s164 = smul.addr %s163, 4
          %s165 = scalar_lea.vmem %s0, %s164
        $region28: #{tpu_custom_call.1} parent=23 // pred_fallthru
          _
        // Predicated region
        $region29: #{tpu_custom_call.1} parent=23 // pred_check
          %p166 = pneg %p59
        $region30: #{tpu_custom_call.1} parent=23 // pred_check_branch
          %168 = sbr.rel (%p166) target = $region32
        $region31: #{tpu_custom_call.1} parent=23 // pred_region
          %p169 = scmp.lt.s32.totalorder %s13, 1
          %s170 = scalar_select %p169, %s13, 1
          %s171 = smul.addr %s170, 2
          %s172 = smul.addr %s171, 8
          %s173 = scalar_lea.vmem %s1, %s172
        $region32: #{tpu_custom_call.1} parent=23 // pred_fallthru
          _
      $region24: #{tpu_custom_call.1} parent=5 // pred_fallthru
        _
      %p174 = scmp.le.s32.totalorder 1, %s13
      %p175 = scmp.lt.s32.totalorder %s13, 3
      %p176 = pnand %p174, %p175
      %p177 = pneg %p176
      // Predicated region
      $region33: #{tpu_custom_call.1} parent=5 // pred_check
        _
      $region34: #{tpu_custom_call.1} parent=5 // pred_check_branch
        %179 = sbr.rel (%p176) target = $region36
      $region35: #{tpu_custom_call.1} parent=5 // pred_region
        %s180 = ssub.s32 %s13, 1
        %p181 = scmp.lt.s32.totalorder %s18, 1
        %s182 = scalar_select %p181, %s18, 1
        %s183 = smul.addr %s182, 28
        %s184 = smul.addr %s183, 4
        %s185 = scalar_lea.vmem %s0, %s184
        %p186 = pneg %p39
        %p187 = pneg %p36
        %p188 = scmp.lt.s32.totalorder %s18, 1
        %s189 = scalar_select %p188, %s18, 1
        %s190 = smul.addr %s189, 2
        %s191 = smul.addr %s190, 8
        %s192 = scalar_lea.vmem %s1, %s191
        %p193 = pneg %p65
        %p194 = pneg %p62
        %p195 = pneg %p86
        %p196 = pneg %p83
        %p197 = pneg %p107
        %p198 = pneg %p104
        %p199 = pneg %p133
        %p200 = pneg %p130
        %s201 = sand.u32 %s120, 1
        %s202 = scalar_lea.sflag [#allocation3], %s201
        %s203 = sand.u32 %s120, 1
        %s204 = smul.addr %s203, 16
        %s205 = scalar_lea.vmem [#allocation2], %s204
        %p206 = scmp.lt.s32.totalorder %s18, 1
        %s207 = scalar_select %p206, %s18, 1
        %s208 = smul.addr %s207, 28
        %s209 = smul.addr %s208, 4
        %s210 = scalar_lea.vmem %s0, %s209
        %p211 = scmp.lt.s32.totalorder %s18, 1
        %s212 = scalar_select %p211, %s18, 1
        %s213 = smul.addr %s212, 2
        %s214 = smul.addr %s213, 8
        %s215 = scalar_lea.vmem %s1, %s214
        %v217 = vld [vmem:[%s2] sm:$0xf]
        %v218 = vld [vmem:[%s2 + $0x4] sm:$0xf]
        %v219 = vld [vmem:[%s2 + $0x8] sm:$0xf]
        %v220 = vld [vmem:[%s2 + $0xc] sm:$0xf]
        %v221 = vld [vmem:[%s2 + $0x10] sm:$0xf]
        %v222 = vld [vmem:[%s210] sm:$0xff]
        %v223 = vld [vmem:[%s210 + $0x8] sm:$0xff]
        %v224 = vld [vmem:[%s210 + $0x10] sm:$0xff]
        %v225 = vld [vmem:[%s210 + $0x18] sm:$0xff]
        %v226 = vld [vmem:[%s210 + $0x20] sm:$0xff]
        %v227 = vld [vmem:[%s210 + $0x28] sm:$0xff]
        %v228 = vld [vmem:[%s210 + $0x30] sm:$0xff]
        %v229 = vld [vmem:[%s210 + $0x38] sm:$0xff]
        %v230 = vld [vmem:[%s210 + $0x40] sm:$0xff]
        %v231 = vld [vmem:[%s210 + $0x48] sm:$0xff]
        %v232 = vld [vmem:[%s210 + $0x50] sm:$0xff]
        %v233 = vld [vmem:[%s210 + $0x58] sm:$0xff]
        %v234 = vld [vmem:[%s210 + $0x60] sm:$0xff]
        %v235 = vld [vmem:[%s210 + $0x68] sm:$0x33]
        %v236 = vld [vmem:[%s3] sm:$0xff]
        %v237 = vld [vmem:[%s3 + $0x8] sm:$0xff]
        %v238 = vld [vmem:[%s3 + $0x10] sm:$0xff]
        %v239 = vld [vmem:[%s3 + $0x18] sm:$0xff]
        %v240 = vld [vmem:[%s3 + $0x20] sm:$0xff]
        %242 = vset.pattern.permute.xlu0 0
        %243 = vperm.xlu0 %242, %v236
        %v244 = vpop.permute.xlu0 %243
        %247 = vset.pattern.permute.xlu0 0
        %248 = vperm.xlu0 %247, %v237
        %v249 = vpop.permute.xlu0 %248
        %252 = vset.pattern.permute.xlu0 0
        %253 = vperm.xlu0 %252, %v238
        %v254 = vpop.permute.xlu0 %253
        %257 = vset.pattern.permute.xlu0 0
        %258 = vperm.xlu0 %257, %v239
        %v259 = vpop.permute.xlu0 %258
        %262 = vset.pattern.permute.xlu0 0
        %263 = vperm.xlu0 %262, %v240
        %v264 = vpop.permute.xlu0 %263
        %v271 = vunpack.c.l.b16 %v217
        %v272 = vunpack.c.l.b16 %v218
        %v273 = vunpack.c.l.b16 %v219
        %v274 = vunpack.c.l.b16 %v220
        %v275 = vunpack.c.l.b16 %v221
        %v276 = vpack.c.b16 %v272, %v271
        %v277 = vpack.c.b16 %v274, %v273
        %v278 = vpack.c.b16 %v275, %v275
        %v293 = vunpack.c.l.b16 %v222
        %v294 = vunpack.c.h.b16 %v222
        %v295 = vunpack.c.l.b16 %v223
        %v296 = vunpack.c.h.b16 %v223
        %v297 = vunpack.c.l.b16 %v224
        %v298 = vunpack.c.h.b16 %v224
        %v299 = vunpack.c.l.b16 %v225
        %v300 = vunpack.c.h.b16 %v225
        %v301 = vunpack.c.l.b16 %v226
        %v302 = vunpack.c.h.b16 %v226
        %v303 = vunpack.c.l.b16 %v227
        %v304 = vunpack.c.h.b16 %v227
        %v305 = vunpack.c.l.b16 %v228
        %v306 = vunpack.c.h.b16 %v228
        %v307 = vunpack.c.l.b16 %v229
        %v308 = vunpack.c.h.b16 %v229
        %v309 = vunpack.c.l.b16 %v230
        %v310 = vunpack.c.h.b16 %v230
        %v311 = vunpack.c.l.b16 %v231
        %v312 = vunpack.c.h.b16 %v231
        %v313 = vunpack.c.l.b16 %v232
        %v314 = vunpack.c.h.b16 %v232
        %v315 = vunpack.c.l.b16 %v233
        %v316 = vunpack.c.h.b16 %v233
        %v317 = vunpack.c.l.b16 %v234
        %v318 = vunpack.c.h.b16 %v234
        %v319 = vunpack.c.l.b16 %v235
        %v320 = vunpack.c.h.b16 %v235
        %v321 = vpack.c.b16 %v295, %v293
        %v322 = vpack.c.b16 %v296, %v294
        %v323 = vpack.c.b16 %v299, %v297
        %v324 = vpack.c.b16 %v300, %v298
        %v325 = vpack.c.b16 %v303, %v301
        %v326 = vpack.c.b16 %v304, %v302
        %v327 = vpack.c.b16 %v307, %v305
        %v328 = vpack.c.b16 %v308, %v306
        %v329 = vpack.c.b16 %v311, %v309
        %v330 = vpack.c.b16 %v312, %v310
        %v331 = vpack.c.b16 %v315, %v313
        %v332 = vpack.c.b16 %v316, %v314
        %v333 = vpack.c.b16 %v319, %v317
        %v334 = vpack.c.b16 %v320, %v318
        %vm347 = vcmask 883712
        %v349 = vsel %vm347, %v276, 0
        %v352 = vsel %vm347, %v277, 0
        %v355 = vsel %vm347, %v278, 0
        %vm357 = vcmask 1045504
        %v359 = vsel %vm357, %v333, 0
        %v362 = vsel %vm357, %v334, 0
        %364 = vmatprep.subr.bf16.mxu0 %v322
        %365 = vmatpush1.bf16.msra.mxu0 %v321
        %366 = vmatprep.subr.bf16.mxu0 %v324
        %367 = vmatpush1.bf16.msra.mxu0 %v323
        %368 = vmatprep.subr.bf16.mxu0 %v326
        %369 = vmatpush1.bf16.msra.mxu0 %v325
        %370 = vmatprep.subr.bf16.mxu0 %v328
        %371 = vmatpush1.bf16.msra.mxu0 %v327
        %372 = vmatprep.subr.bf16.mxu0 %v330
        %373 = vmatpush1.bf16.msra.mxu0 %v329
        %374 = vmatprep.subr.bf16.mxu0 %v332
        %375 = vmatpush1.bf16.msra.mxu0 %v331
        %376 = vmatprep.subr.bf16.mxu0 %v362
        %377 = vmatpush1.bf16.msra.mxu0 %v359
        %378 = vmatprep.subr.bf16.mxu0 0
        %379 = vmatpush1.bf16.msra.mxu0 0
        %380 = vmatprep.subr.bf16.mxu0 0
        %381 = vmatpush1.bf16.msra.mxu0 0
        %382 = vmatprep.subr.bf16.mxu0 0
        %383 = vmatpush1.bf16.msra.mxu0 0
        %384 = vmatprep.subr.bf16.mxu0 0
        %385 = vmatpush1.bf16.msra.mxu0 0
        %386 = vmatprep.subr.bf16.mxu0 0
        %387 = vmatpush1.bf16.msra.mxu0 0
        %388 = vmatprep.subr.bf16.mxu0 0
        %389 = vmatpush1.bf16.msra.mxu0 0
        %390 = vmatprep.subr.bf16.mxu0 0
        %391 = vmatpush1.bf16.msra.mxu0 0
        %392 = vmatprep.subr.bf16.mxu0 0
        %393 = vmatpush1.bf16.msra.mxu0 0
        %394 = vmatprep.subr.bf16.mxu0 0
        %395 = vmatpush1.bf16.msra.mxu0 0
        %396 = vmatprep.mubr.bf16.mxu0 0
        %397 = vmatmul.mubr.bf16.gmra.mrb[0].mxu0 %v349
        %v398 = vpop.f32.mrb[0].mxu0
        %v399 = vadd.f32 %v244, %v398
        %v400 = vpop.f32.mrb[0].mxu0
        %v401 = vadd.f32 %v244, %v400
        %v402 = vpop.f32.mrb[0].mxu0
        %v403 = vadd.f32 %v249, %v402
        %v404 = vpop.f32.mrb[0].mxu0
        %v405 = vadd.f32 %v249, %v404
        %406 = vmatprep.mubr.bf16.mxu0 0
        %407 = vmatmul.mubr.bf16.gmra.mrb[0].mxu0 %v352
        %v408 = vpop.f32.mrb[0].mxu0
        %v409 = vadd.f32 %v254, %v408
        %v410 = vpop.f32.mrb[0].mxu0
        %v411 = vadd.f32 %v254, %v410
        %v412 = vpop.f32.mrb[0].mxu0
        %v413 = vadd.f32 %v259, %v412
        %v414 = vpop.f32.mrb[0].mxu0
        %v415 = vadd.f32 %v259, %v414
        %416 = vmatprep.mubr.bf16.mxu0 0
        %417 = vmatmul.mubr.bf16.gmra.mrb[0].mxu0 %v355
        %v418 = vpop.f32.mrb[0].mxu0
        %v419 = vadd.f32 %v264, %v418
        %v420 = vpop.f32.mrb[0].mxu0
        %v421 = vadd.f32 %v264, %v420
        %v422 = vpop.f32.mrb[0].mxu0
        %v423 = vpop.f32.mrb[0].mxu0
        %424 = vdwg.mxu0
        %v425 = vxor.u32 %v399, 2147483648
        %v426 = vxor.u32 %v401, 2147483648
        %v427 = vmul.f32 %v425, 1.442695
        %v428 = vpow.pop %v427
        %v429 = vmul.f32 %v426, 1.442695
        %v430 = vpow.pop %v429
        %v431 = vadd.f32 %v428, 1.0
        %v432 = vadd.f32 %v430, 1.0
        %v433 = vrcp.pop %v431
        %v434 = vmul.f32 1.0, %v433
        %v435 = vrcp.pop %v432
        %v436 = vmul.f32 1.0, %v435
        %v437 = vxor.u32 %v403, 2147483648
        %v438 = vxor.u32 %v405, 2147483648
        %v439 = vmul.f32 %v437, 1.442695
        %v440 = vpow.pop %v439
        %v441 = vmul.f32 %v438, 1.442695
        %v442 = vpow.pop %v441
        %v443 = vadd.f32 %v440, 1.0
        %v444 = vadd.f32 %v442, 1.0
        %v445 = vrcp.pop %v443
        %v446 = vmul.f32 1.0, %v445
        %v447 = vrcp.pop %v444
        %v448 = vmul.f32 1.0, %v447
        %v449 = vtanh.pop %v409
        %v450 = vtanh.pop %v411
        %v451 = vld [vmem:[%s215] sm:$0xff]
        %v452 = vld [vmem:[%s215 + $0x8] sm:$0xff]
        %v453 = vmul.f32 %v446, %v451
        %v454 = vmul.f32 %v448, %v452
        %v455 = vmul.f32 %v434, %v449
        %v456 = vmul.f32 %v436, %v450
        %v457 = vadd.f32 %v453, %v455
        %v458 = vadd.f32 %v454, %v456
        %v459 = vadd.f32 %v457, %v458
        %460 = vadd.xlane.f32.xlu0 %v459
        %v461 = vpop.xlane.xlu0 %460
        %v462 = vrot.slane %v461, 4
        %v463 = vadd.f32 %v461, %v462
        %v464 = vrot.slane %v463, 2
        %v465 = vadd.f32 %v463, %v464
        %v466 = vrot.slane %v465, 1
        %v467 = vadd.f32 %v465, %v466
        %s468 = vtos %v467
        %v469 = vrcp.pop 2048.0
        %s470 = vtos %v469
        %s471 = smul.f32 %s468, %s470
        %v472 = vmul.f32 %v457, %v457
        %v473 = vmul.f32 %v458, %v458
        %v474 = vadd.f32 %v472, %v473
        %475 = vadd.xlane.f32.xlu0 %v474
        %v476 = vpop.xlane.xlu0 %475
        %v477 = vrot.slane %v476, 4
        %v478 = vadd.f32 %v476, %v477
        %v479 = vrot.slane %v478, 2
        %v480 = vadd.f32 %v478, %v479
        %v481 = vrot.slane %v480, 1
        %v482 = vadd.f32 %v480, %v481
        %s483 = vtos %v482
        %v484 = vrcp.pop 2048.0
        %s485 = vtos %v484
        %s486 = smul.f32 %s483, %s485
        %s487 = smul.f32 %s471, %s471
        %s488 = ssub.f32 %s486, %s487
        %s489 = smax.f32 %s488, 0.0
        %v490 = vstv %s471
        %v491 = vsub.f32 %v457, %v490
        %v492 = vsub.f32 %v458, %v490
        %s493 = sadd.f32 %s489, 1e-05
        %v494 = vstv %s493
        %v495 = vrsqrt.pop %v494
        %s496 = vtos %v495
        %v497 = vstv %s496
        %v498 = vmul.f32 %v491, %v497
        %v499 = vmul.f32 %v492, %v497
        %v500 = vmul.f32 %v498, %v419
        %v501 = vmul.f32 %v499, %v421
        %v502 = vadd.f32 %v500, %v413
        %v503 = vadd.f32 %v501, %v415
        %504 = vst [vmem:[%s205] sm:$0xff] %v502
        %505 = vst [vmem:[%s205 + $0x8] sm:$0xff] %v503
        %s506 = sand.u32 %s120, 1
        %s507 = scalar_lea.sflag [#allocation3], %s506
        %s508 = sand.u32 %s120, 1
        %s509 = smul.addr %s508, 16
        %s510 = scalar_lea.vmem [#allocation2], %s509
        // Predicated region
        $region37: #{tpu_custom_call.1} parent=35 // pred_check
          %p511 = pneg %p130
        $region38: #{tpu_custom_call.1} parent=35 // pred_check_branch
          %513 = sbr.rel (%p511) target = $region40
        $region39: #{tpu_custom_call.1} parent=35 // pred_region
          %s515 = ssub.s32 256, 256
          %516 = vsyncadd %s507, %s515
          %s517 = smul.addr %s18, 2
          %s518 = smul.addr %s517, 128
          %s519 = scalar_lea.hbm %s4, %s518
          %s521 = sshll.u32 %s510, 4
          %s522 = int_to_ptr.vmem [resolvable:$true] %s521
          %524 = dma.vmem_to_hbm [thread:$0]  %s522, 256, %s519, %s507
        $region40: #{tpu_custom_call.1} parent=35 // pred_fallthru
          _
      $region36: #{tpu_custom_call.1} parent=5 // pred_fallthru
        _
      %p525 = scmp.le.s32.totalorder 2, %s13
      // Predicated region
      $region41: #{tpu_custom_call.1} parent=5 // pred_check
        %p526 = pneg %p525
      $region42: #{tpu_custom_call.1} parent=5 // pred_check_branch
        %528 = sbr.rel (%p526) target = $region44
      $region43: #{tpu_custom_call.1} parent=5 // pred_region
        %s529 = ssub.s32 %s13, 2
        // Predicated region
        $region45: #{tpu_custom_call.1} parent=43 // pred_check
          %p530 = pneg %p136
        $region46: #{tpu_custom_call.1} parent=43 // pred_check_branch
          %532 = sbr.rel (%p530) target = $region48
        $region47: #{tpu_custom_call.1} parent=43 // pred_region
          %s533 = sand.u32 %s121, 1
          %s534 = scalar_lea.sflag [#allocation3], %s533
          %s535 = sand.u32 %s121, 1
          %s536 = smul.addr %s535, 16
          %s537 = scalar_lea.vmem [#allocation2], %s536
          %538 = dma.done %s534, 256
        $region48: #{tpu_custom_call.1} parent=43 // pred_fallthru
          _
      $region44: #{tpu_custom_call.1} parent=5 // pred_fallthru
        _
    $region6: #{tpu_custom_call.1} parent=1 // loop_footer
      %s17 = sadd.s32 1, %s13
    $region7: #{tpu_custom_call.1} parent=1 // loop_footer_branch
      %12 = sbr.rel target = $region3
    $region8: #{tpu_custom_call.1} parent=1 // loop_exit
      _
    %539 = vsyncpa [#allocation3], 1
    %s540 = scalar_lea.sflag [#allocation3], 1
    %541 = vsyncpa %s540, 1

</llo_original>
